<compile_context>
chip_gen: v6e
topology: v6e:2x2x1
jax: 0.10.0
libtpu: 0.0.40
codegen_flags: <defaults>
</compile_context>

<pallas_src>
import jax
import jax.numpy as jnp
from jax.experimental import pallas as pl
from jax.experimental.pallas import tpu as pltpu


def _round_up(x, m):
    return ((x + m - 1) // m) * m


def _pick_ffn_tile(requested, F):
    """Largest multiple of 128 that divides F and is <= requested; else full F."""
    t = min(requested, F)
    t = (t // 128) * 128
    while t >= 128:
        if F % t == 0:
            return t
        t -= 128
    return F


def swiglu_mlp_kernel(x_ref, w13_ref, w2_ref, o_ref, acc_ref):
    """Grid step (i, j): token tile i (parallel), FFN reduction tile j (arbitrary)."""
    j = pl.program_id(1)

    @pl.when(j == 0)
    def _():
        acc_ref[...] = jnp.zeros_like(acc_ref)

    x = x_ref[...]                                                      # (tm, H)
    # Fused gate + up projection: ONE MXU matmul producing (tm, 2*tf).
    gu = jnp.dot(x, w13_ref[...], preferred_element_type=jnp.float32)
    tf = gu.shape[-1] // 2
    g = gu[:, :tf]                                                      # w1 (gate)
    u = gu[:, tf:]                                                      # w3 (up)
    h = (g * jax.nn.sigmoid(g)) * u                                     # SiLU(g) * u
    acc_ref[...] += jnp.dot(h.astype(w2_ref.dtype), w2_ref[...],
                            preferred_element_type=jnp.float32)         # (tm, H)

    @pl.when(j == pl.num_programs(1) - 1)
    def _():
        o_ref[...] = acc_ref[...].astype(o_ref.dtype)


def mixtral_mlp(hidden_states, w1_t, w3_t, w2_t, *, tm=256, tf=512,
                compute_dtype=None):
    """SwiGLU MLP: (silu(x @ w1_t) * (x @ w3_t)) @ w2_t.

    hidden_states: (..., H). w1_t/w3_t: (H, F). w2_t: (F, H).
    Returns the same shape (and dtype) as hidden_states.
    """
    H = hidden_states.shape[-1]
    F = w1_t.shape[-1]
    orig_shape = hidden_states.shape
    orig_dtype = hidden_states.dtype

    x = hidden_states.reshape(-1, H)                                    # (T, H)
    T = x.shape[0]

    if compute_dtype is not None:
        x = x.astype(compute_dtype)
        w1_t = w1_t.astype(compute_dtype)
        w3_t = w3_t.astype(compute_dtype)
        w2_t = w2_t.astype(compute_dtype)

    # ---- tile selection (clamped for small shapes) --------------------------
    tf = _pick_ffn_tile(tf, F)
    tm = max(8, min(tm, _round_up(T, 8)))
    tm = _round_up(tm, 8)
    Tp = _round_up(T, tm)
    if Tp != T:
        x = jnp.pad(x, ((0, Tp - T), (0, 0)))
    nf = F // tf

    # ---- fuse gate (w1) and up (w3) weights per FFN tile ---------------------
    # Block j (width 2*tf) of w13_t == [w1_t[:, j*tf:(j+1)*tf] | w3_t[:, j*tf:(j+1)*tf]]
    w13_t = jnp.concatenate(
        [w1_t.reshape(H, nf, tf), w3_t.reshape(H, nf, tf)], axis=-1
    ).reshape(H, nf * 2 * tf)

    # ---- VMEM budget + cost hints --------------------------------------------
    in_bytes = jnp.dtype(x.dtype).itemsize
    out_bytes = jnp.dtype(orig_dtype).itemsize
    vmem_est = (
        2 * (tm * H + H * 2 * tf + tf * H) * in_bytes   # double-buffered inputs
        + 2 * tm * H * out_bytes                        # double-buffered output
        + tm * H * 4                                    # f32 accumulator
        + 3 * tm * tf * 4                               # in-kernel intermediates
        + (2 << 20)                                     # slack
    )
    vmem_limit = int(min(max(vmem_est, 32 * (1 << 20)), 100 * (1 << 20)))

    cost = pl.CostEstimate(
        flops=6 * Tp * H * F,                           # 2*T*H*2F + 2*T*F*H
        transcendentals=Tp * F,                         # sigmoid
        bytes_accessed=(Tp * H * in_bytes + 3 * H * F * in_bytes
                        + Tp * H * out_bytes),
    )

    out = pl.pallas_call(
        swiglu_mlp_kernel,
        out_shape=jax.ShapeDtypeStruct((Tp, H), orig_dtype),
        grid_spec=pltpu.PrefetchScalarGridSpec(
            num_scalar_prefetch=0,
            grid=(Tp // tm, nf),
            in_specs=[
                pl.BlockSpec((tm, H), lambda i, j: (i, 0)),       # x tile
                pl.BlockSpec((H, 2 * tf), lambda i, j: (0, j)),   # fused [w1 | w3]
                pl.BlockSpec((tf, H), lambda i, j: (j, 0)),       # w2_t tile
            ],
            out_specs=pl.BlockSpec((tm, H), lambda i, j: (i, 0)),
            scratch_shapes=[pltpu.VMEM((tm, H), jnp.float32)],
        ),
        compiler_params=pltpu.CompilerParams(
            dimension_semantics=("parallel", "arbitrary"),
            vmem_limit_bytes=vmem_limit),
        cost_estimate=cost,
    )(x, w13_t, w2_t)

    if Tp != T:
        out = out[:T]
    return out.reshape(orig_shape)


def mixtral_mlp_ref(hidden_states, w1_t, w3_t, w2_t):
    g = hidden_states @ w1_t
    u = hidden_states @ w3_t
    return (jax.nn.silu(g) * u) @ w2_t


if __name__ == "__main__":
    # TODO(synk): tensor-parallel sharding of Column/RowParallelLinear is not
    # modeled; this is the single-device (full-weight) forward pass.
    key = jax.random.PRNGKey(0)

    # --- small config matching the module spec: batch=2, seq=8, hidden=32, ffn=256
    B, S, H, F = 2, 8, 32, 256
    kx, k1, k2, k3 = jax.random.split(key, 4)
    hidden_states = jax.random.normal(kx, (B, S, H), dtype=jnp.float32)
    w1 = jax.random.normal(k1, (F, H), dtype=jnp.float32) * 0.02   # ColumnParallel w1
    w3 = jax.random.normal(k3, (F, H), dtype=jnp.float32) * 0.02   # ColumnParallel w3
    w2 = jax.random.normal(k2, (H, F), dtype=jnp.float32) * 0.02   # RowParallel    w2
    w1_t, w3_t, w2_t = w1.T, w3.T, w2.T

    out = mixtral_mlp(hidden_states, w1_t, w3_t, w2_t)
    out = jax.block_until_ready(out)
    ref = mixtral_mlp_ref(hidden_states, w1_t, w3_t, w2_t)
    assert out.shape == hidden_states.shape
    assert jnp.allclose(out, ref, atol=1e-4, rtol=1e-4), "f32 mismatch (small config)"

    # --- slightly larger config to exercise multi-tile grid + FFN reduction ---
    B2, S2, H2, F2 = 2, 128, 128, 512
    kx2, k12, k22, k32 = jax.random.split(jax.random.PRNGKey(0), 4)
    x2 = jax.random.normal(kx2, (B2, S2, H2), dtype=jnp.float32)
    w1b = jax.random.normal(k12, (F2, H2), dtype=jnp.float32) * 0.02
    w3b = jax.random.normal(k32, (F2, H2), dtype=jnp.float32) * 0.02
    w2b = jax.random.normal(k22, (H2, F2), dtype=jnp.float32) * 0.02
    w1b_t, w3b_t, w2b_t = w1b.T, w3b.T, w2b.T

    out2 = mixtral_mlp(x2, w1b_t, w3b_t, w2b_t, tm=128, tf=128)
    out2 = jax.block_until_ready(out2)
    ref2 = mixtral_mlp_ref(x2, w1b_t, w3b_t, w2b_t)
    assert jnp.allclose(out2, ref2, atol=1e-4, rtol=1e-4), "f32 mismatch (tiled config)"

    # --- bf16 compute path (production dtype): loose sanity check -------------
    out3 = mixtral_mlp(x2, w1b_t, w3b_t, w2b_t, tm=128, tf=128,
                       compute_dtype=jnp.bfloat16)
    out3 = jax.block_until_ready(out3)
    assert out3.shape == x2.shape
    assert bool(jnp.all(jnp.isfinite(out3)))
    assert jnp.allclose(out3.astype(jnp.float32), ref2, atol=2e-2, rtol=5e-2), \
        "bf16 path diverged from reference beyond loose tolerance"

    print("KERNEL_OK")
</pallas_src>

<mosaic_0001>
module attributes {stable_mosaic.version = 11 : i64} {
  func.func @swiglu_mlp_kernel(%arg0: i32, %arg1: i32, %arg2: memref<16x32xf32, #tpu.memory_space<vmem>>, %arg3: memref<32x512xf32, #tpu.memory_space<vmem>>, %arg4: memref<256x32xf32, #tpu.memory_space<vmem>>, %arg5: memref<16x32xf32, #tpu.memory_space<vmem>>, %arg6: memref<16x32xf32, #tpu.memory_space<vmem>>) attributes {dimension_semantics = [#tpu.dimension_semantics<parallel>, #tpu.dimension_semantics<arbitrary>], iteration_bounds = array<i64: 1, 1>, scalar_prefetch = 0 : i64, scratch_operands = 1 : i64, tpu.core_type = #tpu.core_type<tc>, window_params = [{transform_indices = @transform_0, window_bounds = array<i64: 16, 32>}, {transform_indices = @transform_1, window_bounds = array<i64: 32, 512>}, {transform_indices = @transform_2, window_bounds = array<i64: 256, 32>}, {transform_indices = @transform_3, window_bounds = array<i64: 16, 32>}]} {
    %c0_i32 = arith.constant 0 : i32
    %0 = arith.cmpi eq, %arg1, %c0_i32 : i32
    %1 = arith.extui %0 : i1 to i32
    %c0_i32_0 = arith.constant 0 : i32
    %2 = arith.cmpi ne, %1, %c0_i32_0 : i32
    scf.if %2 {
      %cst_14 = arith.constant 0.000000e+00 : f32
      %23 = vector.broadcast %cst_14 : f32 to vector<16x32xf32>
      %c0_15 = arith.constant 0 : index
      %c0_16 = arith.constant 0 : index
      %24 = vector.load %arg6[%c0_15, %c0_16] : memref<16x32xf32, #tpu.memory_space<vmem>>, vector<16x32xf32>
      tpu.vector_store %arg6[%c0_15, %c0_16], %23 {strides = array<i32>} : memref<16x32xf32, #tpu.memory_space<vmem>>, vector<16x32xf32>,
    } else {
    }
    %c0 = arith.constant 0 : index
    %c0_1 = arith.constant 0 : index
    %3 = vector.load %arg2[%c0, %c0_1] : memref<16x32xf32, #tpu.memory_space<vmem>>, vector<16x32xf32>
    %c0_2 = arith.constant 0 : index
    %c0_3 = arith.constant 0 : index
    %4 = vector.load %arg3[%c0_2, %c0_3] : memref<32x512xf32, #tpu.memory_space<vmem>>, vector<32x512xf32>
    %cst = arith.constant dense<0.000000e+00> : vector<16x512xf32>
    %5 = tpu.matmul %3, %4, %cst {dimension_numbers = #tpu.dot_dimension_numbers<[1], [0], [0], [1], [0, 0, 1, 1], [], []>} : vector<16x32xf32>, vector<32x512xf32>, vector<16x512xf32> -> vector<16x512xf32>
    %6 = vector.extract_strided_slice %5 {offsets = [0, 0], sizes = [16, 256], strides = [1, 1]} : vector<16x512xf32> to vector<16x256xf32>
    %7 = vector.extract_strided_slice %5 {offsets = [0, 256], sizes = [16, 256], strides = [1, 1]} : vector<16x512xf32> to vector<16x256xf32>
    %8 = arith.negf %6 : vector<16x256xf32>
    %9 = math.exp %8 : vector<16x256xf32>
    %cst_4 = arith.constant 1.000000e+00 : f32
    %10 = vector.broadcast %cst_4 : f32 to vector<16x256xf32>
    %11 = arith.addf %10, %9 : vector<16x256xf32>
    %12 = arith.divf %10, %11 : vector<16x256xf32>
    %13 = arith.mulf %6, %12 : vector<16x256xf32>
    %14 = arith.mulf %13, %7 : vector<16x256xf32>
    %c0_5 = arith.constant 0 : index
    %c0_6 = arith.constant 0 : index
    %15 = vector.load %arg6[%c0_5, %c0_6] : memref<16x32xf32, #tpu.memory_space<vmem>>, vector<16x32xf32>
    %c0_7 = arith.constant 0 : index
    %c0_8 = arith.constant 0 : index
    %16 = vector.load %arg4[%c0_7, %c0_8] : memref<256x32xf32, #tpu.memory_space<vmem>>, vector<256x32xf32>
    %cst_9 = arith.constant dense<0.000000e+00> : vector<16x32xf32>
    %17 = tpu.matmul %14, %16, %cst_9 {dimension_numbers = #tpu.dot_dimension_numbers<[1], [0], [0], [1], [0, 0, 1, 1], [], []>} : vector<16x256xf32>, vector<256x32xf32>, vector<16x32xf32> -> vector<16x32xf32>
    %18 = arith.addf %15, %17 : vector<16x32xf32>
    %c0_10 = arith.constant 0 : index
    %c0_11 = arith.constant 0 : index
    %19 = vector.load %arg6[%c0_10, %c0_11] : memref<16x32xf32, #tpu.memory_space<vmem>>, vector<16x32xf32>
    tpu.vector_store %arg6[%c0_10, %c0_11], %18 {strides = array<i32>} : memref<16x32xf32, #tpu.memory_space<vmem>>, vector<16x32xf32>,
    %c0_i32_12 = arith.constant 0 : i32
    %20 = arith.cmpi eq, %arg1, %c0_i32_12 : i32
    %21 = arith.extui %20 : i1 to i32
    %c0_i32_13 = arith.constant 0 : i32
    %22 = arith.cmpi ne, %21, %c0_i32_13 : i32
    scf.if %22 {
      %c0_14 = arith.constant 0 : index
      %c0_15 = arith.constant 0 : index
      %23 = vector.load %arg6[%c0_14, %c0_15] : memref<16x32xf32, #tpu.memory_space<vmem>>, vector<16x32xf32>
      %c0_16 = arith.constant 0 : index
      %c0_17 = arith.constant 0 : index
      %24 = vector.load %arg5[%c0_16, %c0_17] : memref<16x32xf32, #tpu.memory_space<vmem>>, vector<16x32xf32>
      tpu.vector_store %arg5[%c0_16, %c0_17], %23 {strides = array<i32>} : memref<16x32xf32, #tpu.memory_space<vmem>>, vector<16x32xf32>,
    } else {
    }
    return
  }
  func.func @transform_0(%arg0: i32, %arg1: i32) -> (i32, i32) {
    %c0_i32 = arith.constant 0 : i32
    %c0_i32_0 = arith.constant 0 : i32
    return %arg0, %c0_i32 : i32, i32
  }
  func.func @transform_1(%arg0: i32, %arg1: i32) -> (i32, i32) {
    %c0_i32 = arith.constant 0 : i32
    %c0_i32_0 = arith.constant 0 : i32
    return %c0_i32, %arg1 : i32, i32
  }
  func.func @transform_2(%arg0: i32, %arg1: i32) -> (i32, i32) {
    %c0_i32 = arith.constant 0 : i32
    %c0_i32_0 = arith.constant 0 : i32
    return %arg1, %c0_i32 : i32, i32
  }
  func.func @transform_3(%arg0: i32, %arg1: i32) -> (i32, i32) {
    %c0_i32 = arith.constant 0 : i32
    %c0_i32_0 = arith.constant 0 : i32
    return %arg0, %c0_i32 : i32, i32
  }
}

</mosaic_0001>

<llo_original>
// kernel: tpu_custom_call.1
$region0: #{tpu_custom_call.1}
  #allocation0 [shape = 'u32[]', space=smem, size = 0x4, offset = 0x4, fixed_abs, tag = 'smem constant byte address 0x4 - core index']
  #allocation1 [shape = 'u32[144,128]{1,0:T(1,128)}', space=vmem, size = 0x12000, scoped, tag = 'internal scratch']
  #allocation2 [shape = 'f32[16,32]{1,0:T(8,128)}', space=vmem, size = 0x2000, scoped, tag = 'scratch operand']
  %s0 = inlined_call_operand.vmem [shape: f32[16,32], index: 0, kind: input, shape index: {}]
  %s1 = inlined_call_operand.vmem [shape: f32[32,512], index: 1, kind: input, shape index: {}]
  %s2 = inlined_call_operand.vmem [shape: f32[256,32], index: 2, kind: input, shape index: {}]
  %s3 = inlined_call_operand.hbm [shape: f32[16,32], index: 3, kind: output, shape index: {}]
  %s4 = sld [smem:[#allocation0]]
  $region30: #{tpu_custom_call.1} parent=0
    _
  %s6 = ssub.s32 1, %s4
  %s7 = scalar_select 0, %s6, %s4
  $region1: #{tpu_custom_call.1} parent=0
    #allocation3 [shape = 'u8[8192]{0}', space=vmem, size = 0x2000, scoped, tag = 'output window, operand 0, single buffered']
    #allocation4 [shape = 's32[1]{0}', space=sflag, size = 0x4, scoped, tag = 'scoped memory for tpu_custom_call.1']
    %8 = vsyncpa [#allocation4], 0
    // Predicated region
    $region2: #{tpu_custom_call.1} parent=1 // pred_check
      _
    $region3: #{tpu_custom_call.1} parent=1 // pred_check_branch
      %10 = sbr.rel (0) target = $region5
    $region4: #{tpu_custom_call.1} parent=1 // pred_region
      _
    $region5: #{tpu_custom_call.1} parent=1 // pred_fallthru
      _
    // Predicated region
    $region6: #{tpu_custom_call.1} parent=1 // pred_check
      _
    $region7: #{tpu_custom_call.1} parent=1 // pred_check_branch
      %12 = sbr.rel (0) target = $region9
    $region8: #{tpu_custom_call.1} parent=1 // pred_region
      _
    $region9: #{tpu_custom_call.1} parent=1 // pred_fallthru
      _
    // Predicated region
    $region10: #{tpu_custom_call.1} parent=1 // pred_check
      _
    $region11: #{tpu_custom_call.1} parent=1 // pred_check_branch
      %14 = sbr.rel (0) target = $region13
    $region12: #{tpu_custom_call.1} parent=1 // pred_region
      _
    $region13: #{tpu_custom_call.1} parent=1 // pred_fallthru
      _
    %p15 = scmp.eq.s32.totalorder 0, 0
    // Predicated region
    $region14: #{tpu_custom_call.1} parent=1 // pred_check
      %p16 = pneg %p15
    $region15: #{tpu_custom_call.1} parent=1 // pred_check_branch
      %18 = sbr.rel (%p16) target = $region17
    $region16: #{tpu_custom_call.1} parent=1 // pred_region
      %vm19 = vcmask 261120
      %20 = vst.msk [vmem:[#allocation2] sm:$0xff] %vm19, 0.0
      %21 = vst.msk [vmem:[#allocation2 + $0x8] sm:$0xff] %vm19, 0.0
    $region17: #{tpu_custom_call.1} parent=1 // pred_fallthru
      _
    %v22 = vld [vmem:[%s0] sm:$0xff]
    %v23 = vld [vmem:[%s0 + $0x8] sm:$0xff]
    %v24 = vld [vmem:[%s1] sm:$0xff]
    %v25 = vld [vmem:[%s1 + $0x8] sm:$0xff]
    %v26 = vld [vmem:[%s1 + $0x10] sm:$0xff]
    %v27 = vld [vmem:[%s1 + $0x18] sm:$0xff]
    %v28 = vld [vmem:[%s1 + $0x20] sm:$0xff]
    %v29 = vld [vmem:[%s1 + $0x28] sm:$0xff]
    %v30 = vld [vmem:[%s1 + $0x30] sm:$0xff]
    %v31 = vld [vmem:[%s1 + $0x38] sm:$0xff]
    %v32 = vld [vmem:[%s1 + $0x40] sm:$0xff]
    %v33 = vld [vmem:[%s1 + $0x48] sm:$0xff]
    %v34 = vld [vmem:[%s1 + $0x50] sm:$0xff]
    %v35 = vld [vmem:[%s1 + $0x58] sm:$0xff]
    %v36 = vld [vmem:[%s1 + $0x60] sm:$0xff]
    %v37 = vld [vmem:[%s1 + $0x68] sm:$0xff]
    %v38 = vld [vmem:[%s1 + $0x70] sm:$0xff]
    %v39 = vld [vmem:[%s1 + $0x78] sm:$0xff]
    %vm40 = vcmask 261120
    %v42 = vsel %vm40, %v22, 0
    %v45 = vsel %vm40, %v23, 0
    %47 = vmatprep.subr.mxu0 0.0
    %48 = vmatpush1.msra.mxu0 0.0
    %49 = vmatprep.subr.mxu0 0.0
    %50 = vmatpush1.msra.mxu0 0.0
    %51 = vmatprep.subr.mxu0 0.0
    %52 = vmatpush1.msra.mxu0 0.0
    %53 = vmatprep.subr.mxu0 0.0
    %54 = vmatpush1.msra.mxu0 0.0
    %55 = vmatprep.subr.mxu0 0.0
    %56 = vmatpush1.msra.mxu0 0.0
    %57 = vmatprep.subr.mxu0 0.0
    %58 = vmatpush1.msra.mxu0 0.0
    %59 = vmatprep.subr.mxu0 0.0
    %60 = vmatpush1.msra.mxu0 0.0
    %61 = vmatprep.subr.mxu0 0.0
    %62 = vmatpush1.msra.mxu0 0.0
    %63 = vmatprep.subr.mxu0 0.0
    %64 = vmatpush1.msra.mxu0 0.0
    %65 = vmatprep.subr.mxu0 0.0
    %66 = vmatpush1.msra.mxu0 0.0
    %67 = vmatprep.subr.mxu0 0.0
    %68 = vmatpush1.msra.mxu0 0.0
    %69 = vmatprep.subr.mxu0 0.0
    %70 = vmatpush1.msra.mxu0 0.0
    %71 = vmatprep.subr.mxu0 %v37
    %72 = vmatpush1.msra.mxu0 %v36
    %73 = vmatprep.subr.mxu0 %v33
    %74 = vmatpush1.msra.mxu0 %v32
    %75 = vmatprep.subr.mxu0 %v29
    %76 = vmatpush1.msra.mxu0 %v28
    %77 = vmatprep.subr.mxu0 %v25
    %78 = vmatpush1.msra.mxu0 %v24
    %79 = vmatprep.subr.mxu0 0.0
    %80 = vmatpush2.msra.mxu0 0.0
    %81 = vmatprep.subr.mxu0 0.0
    %82 = vmatpush2.msra.mxu0 0.0
    %83 = vmatprep.subr.mxu0 0.0
    %84 = vmatpush2.msra.mxu0 0.0
    %85 = vmatprep.subr.mxu0 0.0
    %86 = vmatpush2.msra.mxu0 0.0
    %87 = vmatprep.subr.mxu0 0.0
    %88 = vmatpush2.msra.mxu0 0.0
    %89 = vmatprep.subr.mxu0 0.0
    %90 = vmatpush2.msra.mxu0 0.0
    %91 = vmatprep.subr.mxu0 0.0
    %92 = vmatpush2.msra.mxu0 0.0
    %93 = vmatprep.subr.mxu0 0.0
    %94 = vmatpush2.msra.mxu0 0.0
    %95 = vmatprep.subr.mxu0 0.0
    %96 = vmatpush2.msra.mxu0 0.0
    %97 = vmatprep.subr.mxu0 0.0
    %98 = vmatpush2.msra.mxu0 0.0
    %99 = vmatprep.subr.mxu0 0.0
    %100 = vmatpush2.msra.mxu0 0.0
    %101 = vmatprep.subr.mxu0 0.0
    %102 = vmatpush2.msra.mxu0 0.0
    %103 = vmatprep.subr.mxu0 0.0
    %104 = vmatpush2.msra.mxu0 0.0
    %105 = vmatprep.subr.mxu0 0.0
    %106 = vmatpush2.msra.mxu0 0.0
    %107 = vmatprep.subr.mxu0 0.0
    %108 = vmatpush2.msra.mxu0 0.0
    %109 = vmatprep.subr.mxu0 0.0
    %110 = vmatpush2.msra.mxu0 0.0
    %111 = vmatprep.mubr.f32.mxu0 0.0
    %112 = vmatmul.mubr.f32.gmra.mxu0 %v42
    %v113 = vpop.f32.mrf.mxu0
    %v114 = vadd.f32 0.0, %v113
    %v115 = vpop.f32.mrf.mxu0
    %v116 = vadd.f32 0.0, %v115
    %117 = vmatprep.mubr.f32.mxu0 0.0
    %118 = vmatmul.mubr.f32.gmra.mxu0 %v45
    %v119 = vpop.f32.mrf.mxu0
    %v120 = vadd.f32 0.0, %v119
    %v121 = vpop.f32.mrf.mxu0
    %v122 = vadd.f32 0.0, %v121
    %123 = vdwg.mxu0
    %124 = vmatprep.subr.mxu0 0.0
    %125 = vmatpush1.msra.mxu0 0.0
    %126 = vmatprep.subr.mxu0 0.0
    %127 = vmatpush1.msra.mxu0 0.0
    %128 = vmatprep.subr.mxu0 0.0
    %129 = vmatpush1.msra.mxu0 0.0
    %130 = vmatprep.subr.mxu0 0.0
    %131 = vmatpush1.msra.mxu0 0.0
    %132 = vmatprep.subr.mxu0 0.0
    %133 = vmatpush1.msra.mxu0 0.0
    %134 = vmatprep.subr.mxu0 0.0
    %135 = vmatpush1.msra.mxu0 0.0
    %136 = vmatprep.subr.mxu0 0.0
    %137 = vmatpush1.msra.mxu0 0.0
    %138 = vmatprep.subr.mxu0 0.0
    %139 = vmatpush1.msra.mxu0 0.0
    %140 = vmatprep.subr.mxu0 0.0
    %141 = vmatpush1.msra.mxu0 0.0
    %142 = vmatprep.subr.mxu0 0.0
    %143 = vmatpush1.msra.mxu0 0.0
    %144 = vmatprep.subr.mxu0 0.0
    %145 = vmatpush1.msra.mxu0 0.0
    %146 = vmatprep.subr.mxu0 0.0
    %147 = vmatpush1.msra.mxu0 0.0
    %148 = vmatprep.subr.mxu0 %v39
    %149 = vmatpush1.msra.mxu0 %v38
    %150 = vmatprep.subr.mxu0 %v35
    %151 = vmatpush1.msra.mxu0 %v34
    %152 = vmatprep.subr.mxu0 %v31
    %153 = vmatpush1.msra.mxu0 %v30
    %154 = vmatprep.subr.mxu0 %v27
    %155 = vmatpush1.msra.mxu0 %v26
    %156 = vmatprep.subr.mxu0 0.0
    %157 = vmatpush2.msra.mxu0 0.0
    %158 = vmatprep.subr.mxu0 0.0
    %159 = vmatpush2.msra.mxu0 0.0
    %160 = vmatprep.subr.mxu0 0.0
    %161 = vmatpush2.msra.mxu0 0.0
    %162 = vmatprep.subr.mxu0 0.0
    %163 = vmatpush2.msra.mxu0 0.0
    %164 = vmatprep.subr.mxu0 0.0
    %165 = vmatpush2.msra.mxu0 0.0
    %166 = vmatprep.subr.mxu0 0.0
    %167 = vmatpush2.msra.mxu0 0.0
    %168 = vmatprep.subr.mxu0 0.0
    %169 = vmatpush2.msra.mxu0 0.0
    %170 = vmatprep.subr.mxu0 0.0
    %171 = vmatpush2.msra.mxu0 0.0
    %172 = vmatprep.subr.mxu0 0.0
    %173 = vmatpush2.msra.mxu0 0.0
    %174 = vmatprep.subr.mxu0 0.0
    %175 = vmatpush2.msra.mxu0 0.0
    %176 = vmatprep.subr.mxu0 0.0
    %177 = vmatpush2.msra.mxu0 0.0
    %178 = vmatprep.subr.mxu0 0.0
    %179 = vmatpush2.msra.mxu0 0.0
    %180 = vmatprep.subr.mxu0 0.0
    %181 = vmatpush2.msra.mxu0 0.0
    %182 = vmatprep.subr.mxu0 0.0
    %183 = vmatpush2.msra.mxu0 0.0
    %184 = vmatprep.subr.mxu0 0.0
    %185 = vmatpush2.msra.mxu0 0.0
    %186 = vmatprep.subr.mxu0 0.0
    %187 = vmatpush2.msra.mxu0 0.0
    %188 = vmatprep.mubr.f32.mxu0 0.0
    %189 = vmatmul.mubr.f32.gmra.mxu0 %v42
    %v190 = vpop.f32.mrf.mxu0
    %v191 = vadd.f32 0.0, %v190
    %v192 = vpop.f32.mrf.mxu0
    %v193 = vadd.f32 0.0, %v192
    %194 = vmatprep.mubr.f32.mxu0 0.0
    %195 = vmatmul.mubr.f32.gmra.mxu0 %v45
    %v196 = vpop.f32.mrf.mxu0
    %v197 = vadd.f32 0.0, %v196
    %v198 = vpop.f32.mrf.mxu0
    %v199 = vadd.f32 0.0, %v198
    %200 = vdwg.mxu0
    %v201 = vxor.u32 %v114, 2147483648
    %v202 = vxor.u32 %v116, 2147483648
    %v203 = vxor.u32 %v120, 2147483648
    %v204 = vxor.u32 %v122, 2147483648
    %v205 = vmul.f32 %v201, 1.442695
    %v206 = vpow.pop %v205
    %v207 = vmul.f32 %v202, 1.442695
    %v208 = vpow.pop %v207
    %v209 = vmul.f32 %v203, 1.442695
    %v210 = vpow.pop %v209
    %v211 = vmul.f32 %v204, 1.442695
    %v212 = vpow.pop %v211
    %v213 = vadd.f32 %v206, 1.0
    %v214 = vadd.f32 %v208, 1.0
    %v215 = vadd.f32 %v210, 1.0
    %v216 = vadd.f32 %v212, 1.0
    %v217 = vrcp.pop %v213
    %v218 = vmul.f32 1.0, %v217
    %v219 = vrcp.pop %v214
    %v220 = vmul.f32 1.0, %v219
    %v221 = vrcp.pop %v215
    %v222 = vmul.f32 1.0, %v221
    %v223 = vrcp.pop %v216
    %v224 = vmul.f32 1.0, %v223
    %v225 = vmul.f32 %v114, %v218
    %v226 = vmul.f32 %v116, %v220
    %v227 = vmul.f32 %v120, %v222
    %v228 = vmul.f32 %v122, %v224
    %v229 = vmul.f32 %v225, %v191
    %v230 = vmul.f32 %v226, %v193
    %v231 = vmul.f32 %v227, %v197
    %v232 = vmul.f32 %v228, %v199
    %v233 = vld [vmem:[#allocation2] sm:$0xff]
    %v234 = vld [vmem:[#allocation2 + $0x8] sm:$0xff]
    %v235 = vld [vmem:[%s2] sm:$0xff]
    %v236 = vld [vmem:[%s2 + $0x8] sm:$0xff]
    %v237 = vld [vmem:[%s2 + $0x10] sm:$0xff]
    %v238 = vld [vmem:[%s2 + $0x18] sm:$0xff]
    %v239 = vld [vmem:[%s2 + $0x20] sm:$0xff]
    %v240 = vld [vmem:[%s2 + $0x28] sm:$0xff]
    %v241 = vld [vmem:[%s2 + $0x30] sm:$0xff]
    %v242 = vld [vmem:[%s2 + $0x38] sm:$0xff]
    %v243 = vld [vmem:[%s2 + $0x40] sm:$0xff]
    %v244 = vld [vmem:[%s2 + $0x48] sm:$0xff]
    %v245 = vld [vmem:[%s2 + $0x50] sm:$0xff]
    %v246 = vld [vmem:[%s2 + $0x58] sm:$0xff]
    %v247 = vld [vmem:[%s2 + $0x60] sm:$0xff]
    %v248 = vld [vmem:[%s2 + $0x68] sm:$0xff]
    %v249 = vld [vmem:[%s2 + $0x70] sm:$0xff]
    %v250 = vld [vmem:[%s2 + $0x78] sm:$0xff]
    %v251 = vld [vmem:[%s2 + $0x80] sm:$0xff]
    %v252 = vld [vmem:[%s2 + $0x88] sm:$0xff]
    %v253 = vld [vmem:[%s2 + $0x90] sm:$0xff]
    %v254 = vld [vmem:[%s2 + $0x98] sm:$0xff]
    %v255 = vld [vmem:[%s2 + $0xa0] sm:$0xff]
    %v256 = vld [vmem:[%s2 + $0xa8] sm:$0xff]
    %v257 = vld [vmem:[%s2 + $0xb0] sm:$0xff]
    %v258 = vld [vmem:[%s2 + $0xb8] sm:$0xff]
    %v259 = vld [vmem:[%s2 + $0xc0] sm:$0xff]
    %v260 = vld [vmem:[%s2 + $0xc8] sm:$0xff]
    %v261 = vld [vmem:[%s2 + $0xd0] sm:$0xff]
    %v262 = vld [vmem:[%s2 + $0xd8] sm:$0xff]
    %v263 = vld [vmem:[%s2 + $0xe0] sm:$0xff]
    %v264 = vld [vmem:[%s2 + $0xe8] sm:$0xff]
    %v265 = vld [vmem:[%s2 + $0xf0] sm:$0xff]
    %v266 = vld [vmem:[%s2 + $0xf8] sm:$0xff]
    %267 = vmatprep.subr.mxu0 0.0
    %268 = vmatpush1.msra.mxu0 %v250
    %269 = vmatprep.subr.mxu0 0.0
    %270 = vmatpush1.msra.mxu0 %v249
    %271 = vmatprep.subr.mxu0 0.0
    %272 = vmatpush1.msra.mxu0 %v248
    %273 = vmatprep.subr.mxu0 0.0
    %274 = vmatpush1.msra.mxu0 %v247
    %275 = vmatprep.subr.mxu0 0.0
    %276 = vmatpush1.msra.mxu0 %v246
    %277 = vmatprep.subr.mxu0 0.0
    %278 = vmatpush1.msra.mxu0 %v245
    %279 = vmatprep.subr.mxu0 0.0
    %280 = vmatpush1.msra.mxu0 %v244
    %281 = vmatprep.subr.mxu0 0.0
    %282 = vmatpush1.msra.mxu0 %v243
    %283 = vmatprep.subr.mxu0 0.0
    %284 = vmatpush1.msra.mxu0 %v242
    %285 = vmatprep.subr.mxu0 0.0
    %286 = vmatpush1.msra.mxu0 %v241
    %287 = vmatprep.subr.mxu0 0.0
    %288 = vmatpush1.msra.mxu0 %v240
    %289 = vmatprep.subr.mxu0 0.0
    %290 = vmatpush1.msra.mxu0 %v239
    %291 = vmatprep.subr.mxu0 0.0
    %292 = vmatpush1.msra.mxu0 %v238
    %293 = vmatprep.subr.mxu0 0.0
    %294 = vmatpush1.msra.mxu0 %v237
    %295 = vmatprep.subr.mxu0 0.0
    %296 = vmatpush1.msra.mxu0 %v236
    %297 = vmatprep.subr.mxu0 0.0
    %298 = vmatpush1.msra.mxu0 %v235
    %299 = vmatprep.subr.mxu0 0.0
    %300 = vmatpush2.msra.mxu0 %v266
    %301 = vmatprep.subr.mxu0 0.0
    %302 = vmatpush2.msra.mxu0 %v265
    %303 = vmatprep.subr.mxu0 0.0
    %304 = vmatpush2.msra.mxu0 %v264
    %305 = vmatprep.subr.mxu0 0.0
    %306 = vmatpush2.msra.mxu0 %v263
    %307 = vmatprep.subr.mxu0 0.0
    %308 = vmatpush2.msra.mxu0 %v262
    %309 = vmatprep.subr.mxu0 0.0
    %310 = vmatpush2.msra.mxu0 %v261
    %311 = vmatprep.subr.mxu0 0.0
    %312 = vmatpush2.msra.mxu0 %v260
    %313 = vmatprep.subr.mxu0 0.0
    %314 = vmatpush2.msra.mxu0 %v259
    %315 = vmatprep.subr.mxu0 0.0
    %316 = vmatpush2.msra.mxu0 %v258
    %317 = vmatprep.subr.mxu0 0.0
    %318 = vmatpush2.msra.mxu0 %v257
    %319 = vmatprep.subr.mxu0 0.0
    %320 = vmatpush2.msra.mxu0 %v256
    %321 = vmatprep.subr.mxu0 0.0
    %322 = vmatpush2.msra.mxu0 %v255
    %323 = vmatprep.subr.mxu0 0.0
    %324 = vmatpush2.msra.mxu0 %v254
    %325 = vmatprep.subr.mxu0 0.0
    %326 = vmatpush2.msra.mxu0 %v253
    %327 = vmatprep.subr.mxu0 0.0
    %328 = vmatpush2.msra.mxu0 %v252
    %329 = vmatprep.subr.mxu0 0.0
    %330 = vmatpush2.msra.mxu0 %v251
    %331 = vmatprep.mubr.f32.mxu0 %v230
    %332 = vmatmul.mubr.f32.gmra.mxu0 %v229
    %v333 = vpop.f32.mrf.mxu0
    %v334 = vadd.f32 0.0, %v333
    %v335 = vpop.f32.mrf.mxu0
    %336 = vmatprep.mubr.f32.mxu0 %v232
    %337 = vmatmul.mubr.f32.gmra.mxu0 %v231
    %v338 = vpop.f32.mrf.mxu0
    %v339 = vadd.f32 0.0, %v338
    %v340 = vpop.f32.mrf.mxu0
    %341 = vdwg.mxu0
    %v342 = vadd.f32 %v233, %v334
    %v343 = vadd.f32 %v234, %v339
    %344 = vst.msk [vmem:[#allocation2] sm:$0xff] %vm40, %v342
    %345 = vst.msk [vmem:[#allocation2 + $0x8] sm:$0xff] %vm40, %v343
    // Predicated region
    $region18: #{tpu_custom_call.1} parent=1 // pred_check
      %p346 = pneg %p15
    $region19: #{tpu_custom_call.1} parent=1 // pred_check_branch
      %348 = sbr.rel (%p346) target = $region21
    $region20: #{tpu_custom_call.1} parent=1 // pred_region
      %v349 = vld [vmem:[#allocation2] sm:$0xff]
      %v350 = vld [vmem:[#allocation2 + $0x8] sm:$0xff]
      %351 = vst.msk [vmem:[#allocation3] sm:$0xff] %vm40, %v349
      %352 = vst.msk [vmem:[#allocation3 + $0x8] sm:$0xff] %vm40, %v350
    $region21: #{tpu_custom_call.1} parent=1 // pred_fallthru
      _
    // Predicated region
    $region22: #{tpu_custom_call.1} parent=1 // pred_check
      _
    $region23: #{tpu_custom_call.1} parent=1 // pred_check_branch
      %354 = sbr.rel (0) target = $region25
    $region24: #{tpu_custom_call.1} parent=1 // pred_region
      %s356 = ssub.s32 256, 256
      %357 = vsyncadd [#allocation4], %s356
      %s358 = sshll.u32 [#allocation3], 4
      %s359 = int_to_ptr.vmem [resolvable:$true] %s358
      %364 = dma.vmem_to_hbm [thread:$0]  %s359, 256, %s3, [#allocation4], 128, 128, 8
    $region25: #{tpu_custom_call.1} parent=1 // pred_fallthru
      _
    // Predicated region
    $region26: #{tpu_custom_call.1} parent=1 // pred_check
      _
    $region27: #{tpu_custom_call.1} parent=1 // pred_check_branch
      %366 = sbr.rel (0) target = $region29
    $region28: #{tpu_custom_call.1} parent=1 // pred_region
      %367 = dma.done [#allocation4], 256
    $region29: #{tpu_custom_call.1} parent=1 // pred_fallthru
      _
    %368 = vsyncpa [#allocation4], 1

</llo_original>
